<compile_context>
chip_gen: v7x
topology: tpu7x:2x2x1
jax: 0.10.0
libtpu: 0.0.40
codegen_flags: <defaults>
</compile_context>

<pallas_src>
import functools
import math

import jax
import jax.numpy as jnp
from jax.experimental import pallas as pl
from jax.experimental.pallas import tpu as pltpu

D_VIS = 768    # ViT-B-16 patch-token width (hard-coded in the module)
D_PROJ = 512   # projection width (hard-coded in the module)

_VMEM_BUDGET = 40 << 20   # flat-sum working-set budget used to pick the batch tile


# ---------------- in-kernel helpers ----------------

def _layernorm(x, g, b, eps=1e-5):
    mu = jnp.mean(x, axis=-1, keepdims=True)
    var = jnp.mean((x - mu) ** 2, axis=-1, keepdims=True)
    return (x - mu) * jax.lax.rsqrt(var + eps) * g + b


def _gelu_exact(x):
    # matches torch.nn.GELU() (erf formulation)
    return 0.5 * x * (1.0 + jax.lax.erf(x * (1.0 / math.sqrt(2.0))))


def _l2norm(x):
    # matches F.normalize(dim=-1, eps=1e-12): divide by max(||x||, 1e-12)
    ss = jnp.sum(x * x, axis=-1, keepdims=True)
    return x * jax.lax.rsqrt(jnp.maximum(ss, 1e-24))


def _round_up(x, m):
    return ((x + m - 1) // m) * m


# ---------------- text-branch kernel (one whole-batch call) ----------------

def text_kernel(tc_ref, gt_ref, bt_ref, wt_ref, btl_ref, that_ref):
    t = tc_ref[...].astype(jnp.float32)                              # [B, 512]
    tln = _layernorm(t, gt_ref[...], bt_ref[...])
    # Dropout(0.1): identity in eval mode
    tproj = jnp.dot(tln.astype(wt_ref.dtype), wt_ref[...],
                    preferred_element_type=jnp.float32) + btl_ref[...]
    that_ref[...] = _l2norm(tproj)                                   # [B, 512]


# ---------------- visual-branch + pooling kernel (TB batch elems / step) -------

def pacl_visual_kernel(n_valid, vp_ref, that_ref, gv_ref, bv_ref,
                       w12_ref, b12_ref, w3_ref, b3_ref, pooled_ref):
    TB, Np, _ = vp_ref.shape
    cdt = w12_ref.dtype                                              # MXU operand dtype

    # ---- LayerNorm(768) on the flattened (TB*Np, 768) token slab (f32 math) ----
    # Np is a multiple of 8, so this reshape is layout-free.
    x = vp_ref[...].reshape(TB * Np, D_VIS).astype(jnp.float32)
    xln = _layernorm(x, gv_ref[...], bv_ref[...])
    # Dropout(0.1): identity in eval mode

    # ---- fused Linear(768,512) | Linear(768,512): one K=768 matmul, split cols
    h12 = jnp.dot(xln.astype(cdt), w12_ref[...],
                  preferred_element_type=jnp.float32) + b12_ref[...]  # [TB*Np, 1024]
    lin = h12[:, :D_PROJ]
    # GELU kept in f32 (v5e VPU has no bf16); erf chain feeds the W3 matmul.
    h = _gelu_exact(h12[:, D_PROJ:])
    nlin = jnp.dot(h.astype(cdt), w3_ref[...],
                   preferred_element_type=jnp.float32) + b3_ref[...]
    vproj = (lin + nlin).reshape(TB, Np, D_PROJ)                      # [TB, Np, 512]

    # ---- patch alignment + pooling (no l2norm(vproj) materialization) ----
    # sigmoid(10 * <vhat, that>) == sigmoid(10 * dot / max(||vproj||, 1e-12))
    that = that_ref[...]                                              # [TB, 512] pre-normalized
    dot = jnp.sum(vproj * that[:, None, :], axis=-1, keepdims=True)   # [TB, Np, 1]
    ss = jnp.sum(vproj * vproj, axis=-1, keepdims=True)               # [TB, Np, 1]
    act = jax.nn.sigmoid(10.0 * dot * jax.lax.rsqrt(jnp.maximum(ss, 1e-24)))
    if Np != n_valid:
        # Pad tokens have nonzero vproj (LN + bias) and sigmoid never returns 0:
        # mask them out of the pooling sum.
        tok = jax.lax.broadcasted_iota(jnp.int32, (TB, Np, 1), 1)
        act = jnp.where(tok < n_valid, act, 0.0)
    pooled = jnp.sum(vproj * act, axis=1)                             # [TB, 512]
    pooled_ref[...] = _l2norm(pooled)


# ---------------- tiling / VMEM heuristics ----------------

def _visual_vmem_bytes(TB, Np, in_item, w_item):
    """Flat-sum upper bound (bytes) of one grid step's VMEM working set."""
    toks = TB * Np
    in_tile = 2 * toks * D_VIS * in_item                    # double-buffered patch tile
    small_io = 2 * (2 * TB * D_PROJ * 4)                    # `that` in + pooled out (x2 bufs)
    weights = 2 * ((D_VIS * 2 * D_PROJ + D_PROJ * D_PROJ) * w_item
                   + (2 * D_PROJ + D_PROJ + 2 * D_VIS) * 4)  # consts (double-buffered)
    per_tok = (2 * D_VIS * 4 + D_VIS * w_item               # x, xln, xln->cdt cast
               + 2 * D_PROJ * 4                             # h12
               + D_PROJ * (4 + w_item)                      # gelu(h), h->cdt cast
               + 2 * D_PROJ * 4                             # nlin, vproj
               + 3 * 4)                                     # dot / ss / act columns
    return in_tile + small_io + weights + toks * per_tok


def _choose_tb(B, Np, in_item, w_item, budget=_VMEM_BUDGET):
    """Pick a batch tile: a sublane-aligned divisor of B (or B itself) whose
    working set fits `budget`, preferring >=4 grid steps (>=2 per v7x core)
    while keeping the MXU M-dim (TB*Np rows) fat."""
    cands = [d for d in range(1, B + 1)
             if B % d == 0 and (d == B or d % 8 == 0)
             and _visual_vmem_bytes(d, Np, in_item, w_item) <= budget]
    for min_steps, min_rows in ((4, 512), (2, 256), (1, 0)):
        ok = [d for d in cands if B // d >= min_steps and d * Np >= min_rows]
        if ok:
            return max(ok)
    # Rare fallback (no sublane-aligned divisor of B fits VMEM): use an aligned
    # tile and pad the batch in the wrapper (one extra HBM copy of the bf16 stream).
    tb = 8
    while (B // (2 * tb) >= 4
           and _visual_vmem_bytes(2 * tb, Np, in_item, w_item) <= budget):
        tb *= 2
    return tb


def _vmem_limit_bytes(TB, Np, in_item, w_item):
    est = _visual_vmem_bytes(TB, Np, in_item, w_item)
    return int(min(max(int(est * 1.25), 20 << 20), 56 << 20))


# ---------------- param preparation (hoisted out of the per-call path) ----------

def prepare_params(params, compute_dtype=jnp.bfloat16):
    """Fuse W1|W2, cast MXU weights once. Returns a dict consumed by pacl_forward."""
    (gv, bv, w1, b1, w2, b2, w3, b3, gt, bt, wt, btl) = params
    cdt = jnp.dtype(compute_dtype)
    w12 = jnp.concatenate([w1, w2], axis=1).astype(cdt)              # [768, 1024]
    b12 = jnp.concatenate([b1, b2], axis=1)                          # [1, 1024] f32
    return dict(gv=gv, bv=bv, w12=w12, b12=b12, w3=w3.astype(cdt), b3=b3,
                gt=gt, bt=bt, wt=wt.astype(cdt), btl=btl, compute_dtype=cdt)


# ---------------- wrapper ----------------

def pacl_forward(visual_patches, text_cls, prepared, tb=None):
    gv, bv = prepared["gv"], prepared["bv"]
    w12, b12 = prepared["w12"], prepared["b12"]
    w3c, b3 = prepared["w3"], prepared["b3"]
    gt, bt = prepared["gt"], prepared["bt"]
    wtc, btl = prepared["wt"], prepared["btl"]
    cdt = prepared["compute_dtype"]

    B, N, _ = visual_patches.shape
    Np = _round_up(N, 8)                                              # layout-free flatten

    # Stream patches as bf16 (halves HBM traffic + input VMEM tile); keep f32
    # streaming only for the bit-tight f32 MXU path.
    in_dtype = jnp.float32 if cdt == jnp.float32 else jnp.bfloat16
    vp = visual_patches.astype(in_dtype)

    in_item = jnp.dtype(in_dtype).itemsize
    w_item = jnp.dtype(cdt).itemsize
    TB = tb if tb is not None else _choose_tb(B, Np, in_item, w_item)
    Bp = _round_up(B, TB)                                             # == B except rare fallback

    pad_b, pad_n = Bp - B, Np - N
    if pad_b or pad_n:
        vp = jnp.pad(vp, ((0, pad_b), (0, pad_n), (0, 0)))
    text_in = jnp.pad(text_cls, ((0, pad_b), (0, 0))) if pad_b else text_cls

    # ---- text branch: single whole-batch call (M = Bp matmul) ----
    that = pl.pallas_call(
        text_kernel,
        out_shape=jax.ShapeDtypeStruct((Bp, D_PROJ), jnp.float32),
    )(text_in, gt, bt, wtc, btl)

    # ---- visual branch + pooling, batch-tiled grid ----
    grid = (Bp // TB,)
    in_specs = [
        pl.BlockSpec((TB, Np, D_VIS), lambda i: (i, 0, 0)),           # patch-token tile
        pl.BlockSpec((TB, D_PROJ), lambda i: (i, 0)),                 # normalized text tile
        pl.BlockSpec((1, D_VIS), lambda i: (0, 0)),                   # LN(768) gamma
        pl.BlockSpec((1, D_VIS), lambda i: (0, 0)),                   # LN(768) beta
        pl.BlockSpec((D_VIS, 2 * D_PROJ), lambda i: (0, 0)),          # fused W1|W2
        pl.BlockSpec((1, 2 * D_PROJ), lambda i: (0, 0)),              # fused b1|b2
        pl.BlockSpec((D_PROJ, D_PROJ), lambda i: (0, 0)),             # W3
        pl.BlockSpec((1, D_PROJ), lambda i: (0, 0)),                  # b3
    ]
    out_specs = pl.BlockSpec((TB, D_PROJ), lambda i: (i, 0))

    pooled = pl.pallas_call(
        functools.partial(pacl_visual_kernel, N),
        grid=grid,
        in_specs=in_specs,
        out_specs=out_specs,
        out_shape=jax.ShapeDtypeStruct((Bp, D_PROJ), jnp.float32),
        compiler_params=pltpu.CompilerParams(
            dimension_semantics=("parallel",),
            vmem_limit_bytes=_vmem_limit_bytes(TB, Np, in_item, w_item)),
    )(vp, that, gv, bv, w12, b12, w3c, b3)

    return pooled[:B], that[:B]


# ---------------- pure-JAX reference (for sanity check) ----------------

def pacl_forward_ref(vp, tc, params):
    (gv, bv, w1, b1, w2, b2, w3, b3, gt, bt, wt, btl) = params
    xln = _layernorm(vp, gv, bv)
    vproj = (xln @ w1 + b1) + (_gelu_exact(xln @ w2 + b2) @ w3 + b3)
    tln = _layernorm(tc, gt[0], bt[0])
    tproj = tln @ wt + btl[0]
    vhat = _l2norm(vproj)
    that = _l2norm(tproj)
    act = jax.nn.sigmoid(10.0 * jnp.einsum("bnd,bd->bn", vhat, that))
    pooled = jnp.sum(vproj * act[..., None], axis=1)
    return _l2norm(pooled), that


def init_params(key):
    ks = jax.random.split(key, 8)
    scale = 0.02
    gv = jnp.ones((1, D_VIS), jnp.float32)
    bv = jnp.zeros((1, D_VIS), jnp.float32)
    # weights stored as [in, out] (transposed relative to torch nn.Linear storage)
    w1 = scale * jax.random.normal(ks[0], (D_VIS, D_PROJ), jnp.float32)
    b1 = scale * jax.random.normal(ks[1], (1, D_PROJ), jnp.float32)
    w2 = scale * jax.random.normal(ks[2], (D_VIS, D_PROJ), jnp.float32)
    b2 = scale * jax.random.normal(ks[3], (1, D_PROJ), jnp.float32)
    w3 = scale * jax.random.normal(ks[4], (D_PROJ, D_PROJ), jnp.float32)
    b3 = scale * jax.random.normal(ks[5], (1, D_PROJ), jnp.float32)
    gt = jnp.ones((1, D_PROJ), jnp.float32)
    bt = jnp.zeros((1, D_PROJ), jnp.float32)
    wt = scale * jax.random.normal(ks[6], (D_PROJ, D_PROJ), jnp.float32)
    btl = scale * jax.random.normal(ks[7], (1, D_PROJ), jnp.float32)
    return (gv, bv, w1, b1, w2, b2, w3, b3, gt, bt, wt, btl)


if __name__ == "__main__":
    B, N = 2, 16  # small: 2 images, 16 patch tokens each
    key = jax.random.PRNGKey(0)
    kv, kt, kp = jax.random.split(key, 3)
    visual_patches = jax.random.normal(kv, (B, N, D_VIS), jnp.float32)  # backbone patch tokens
    text_cls = jax.random.normal(kt, (B, D_PROJ), jnp.float32)          # backbone text CLS
    params = init_params(kp)

    pooled_ref, text_ref = pacl_forward_ref(visual_patches, text_cls, params)

    # exact f32 MXU path: tight check against the pure-JAX / torch-equivalent reference
    prep_f32 = prepare_params(params, jnp.float32)
    pooled32, text32 = pacl_forward(visual_patches, text_cls, prep_f32)
    jax.block_until_ready((pooled32, text32))
    assert jnp.allclose(pooled32, pooled_ref, atol=1e-4, rtol=1e-4)
    assert jnp.allclose(text32, text_ref, atol=1e-4, rtol=1e-4)

    # default bf16 path (bf16 patch stream + bf16 MXU operands, f32 accumulation)
    prep_bf16 = prepare_params(params, jnp.bfloat16)
    pooled, text = pacl_forward(visual_patches, text_cls, prep_bf16)
    jax.block_until_ready((pooled, text))
    assert jnp.allclose(pooled, pooled_ref, atol=3e-2, rtol=3e-2)
    assert jnp.allclose(text, text_ref, atol=3e-2, rtol=3e-2)

    print("KERNEL_OK")
</pallas_src>

<mosaic_0001>
module attributes {stable_mosaic.version = 11 : i64} {
  func.func @text_kernel(%arg0: memref<2x512xf32, #tpu.memory_space<vmem>>, %arg1: memref<1x512xf32, #tpu.memory_space<vmem>>, %arg2: memref<1x512xf32, #tpu.memory_space<vmem>>, %arg3: memref<512x512xf32, #tpu.memory_space<vmem>>, %arg4: memref<1x512xf32, #tpu.memory_space<vmem>>, %arg5: memref<2x512xf32, #tpu.memory_space<vmem>>) attributes {dimension_semantics = [], scalar_prefetch = 0 : i64, scratch_operands = 0 : i64, tpu.core_type = #tpu.core_type<tc>} {
    %c0 = arith.constant 0 : index
    %c0_0 = arith.constant 0 : index
    %0 = vector.load %arg0[%c0, %c0_0] : memref<2x512xf32, #tpu.memory_space<vmem>>, vector<2x512xf32>
    %c0_1 = arith.constant 0 : index
    %c0_2 = arith.constant 0 : index
    %1 = vector.load %arg1[%c0_1, %c0_2] : memref<1x512xf32, #tpu.memory_space<vmem>>, vector<1x512xf32>
    %c0_3 = arith.constant 0 : index
    %c0_4 = arith.constant 0 : index
    %2 = vector.load %arg2[%c0_3, %c0_4] : memref<1x512xf32, #tpu.memory_space<vmem>>, vector<1x512xf32>
    %cst = arith.constant dense<0.000000e+00> : vector<2xf32>
    %3 = vector.multi_reduction <add>, %0, %cst [1] : vector<2x512xf32> to vector<2xf32>
    %4 = vector.shape_cast %3 : vector<2xf32> to vector<2x1xf32>
    %cst_5 = arith.constant 5.120000e+02 : f32
    %5 = vector.broadcast %cst_5 : f32 to vector<2x1xf32>
    %6 = arith.divf %4, %5 : vector<2x1xf32>
    %7 = vector.broadcast %6 : vector<2x1xf32> to vector<2x512xf32>
    %8 = arith.subf %0, %7 : vector<2x512xf32>
    %9 = arith.mulf %8, %8 : vector<2x512xf32>
    %cst_6 = arith.constant dense<0.000000e+00> : vector<2xf32>
    %10 = vector.multi_reduction <add>, %9, %cst_6 [1] : vector<2x512xf32> to vector<2xf32>
    %11 = vector.shape_cast %10 : vector<2xf32> to vector<2x1xf32>
    %cst_7 = arith.constant 5.120000e+02 : f32
    %12 = vector.broadcast %cst_7 : f32 to vector<2x1xf32>
    %13 = arith.divf %11, %12 : vector<2x1xf32>
    %14 = vector.broadcast %6 : vector<2x1xf32> to vector<2x512xf32>
    %15 = arith.subf %0, %14 : vector<2x512xf32>
    %cst_8 = arith.constant 9.99999974E-6 : f32
    %16 = vector.broadcast %cst_8 : f32 to vector<2x1xf32>
    %17 = arith.addf %13, %16 : vector<2x1xf32>
    %18 = math.rsqrt %17 : vector<2x1xf32>
    %19 = vector.broadcast %18 : vector<2x1xf32> to vector<2x512xf32>
    %20 = arith.mulf %15, %19 : vector<2x512xf32>
    %21 = vector.broadcast %1 : vector<1x512xf32> to vector<2x512xf32>
    %22 = arith.mulf %20, %21 : vector<2x512xf32>
    %23 = vector.broadcast %2 : vector<1x512xf32> to vector<2x512xf32>
    %24 = arith.addf %22, %23 : vector<2x512xf32>
    %c0_9 = arith.constant 0 : index
    %c0_10 = arith.constant 0 : index
    %25 = vector.load %arg3[%c0_9, %c0_10] : memref<512x512xf32, #tpu.memory_space<vmem>>, vector<512x512xf32>
    %cst_11 = arith.constant dense<0.000000e+00> : vector<2x512xf32>
    %26 = tpu.matmul %24, %25, %cst_11 {dimension_numbers = #tpu.dot_dimension_numbers<[1], [0], [0], [1], [0, 0, 1, 1], [], []>} : vector<2x512xf32>, vector<512x512xf32>, vector<2x512xf32> -> vector<2x512xf32>
    %c0_12 = arith.constant 0 : index
    %c0_13 = arith.constant 0 : index
    %27 = vector.load %arg4[%c0_12, %c0_13] : memref<1x512xf32, #tpu.memory_space<vmem>>, vector<1x512xf32>
    %28 = vector.broadcast %27 : vector<1x512xf32> to vector<2x512xf32>
    %29 = arith.addf %26, %28 : vector<2x512xf32>
    %30 = arith.mulf %29, %29 : vector<2x512xf32>
    %cst_14 = arith.constant dense<0.000000e+00> : vector<2xf32>
    %31 = vector.multi_reduction <add>, %30, %cst_14 [1] : vector<2x512xf32> to vector<2xf32>
    %32 = vector.shape_cast %31 : vector<2xf32> to vector<2x1xf32>
    %cst_15 = arith.constant 1.000000e-24 : f32
    %33 = vector.broadcast %cst_15 : f32 to vector<2x1xf32>
    %34 = arith.maximumf %32, %33 : vector<2x1xf32>
    %35 = math.rsqrt %34 : vector<2x1xf32>
    %36 = vector.broadcast %35 : vector<2x1xf32> to vector<2x512xf32>
    %37 = arith.mulf %29, %36 : vector<2x512xf32>
    %c0_16 = arith.constant 0 : index
    %c0_17 = arith.constant 0 : index
    %38 = vector.load %arg5[%c0_16, %c0_17] : memref<2x512xf32, #tpu.memory_space<vmem>>, vector<2x512xf32>
    tpu.vector_store %arg5[%c0_16, %c0_17], %37 {strides = array<i32>} : memref<2x512xf32, #tpu.memory_space<vmem>>, vector<2x512xf32>,
    return
  }
}

</mosaic_0001>

<llo_original>
// kernel: tpu_custom_call.1
$region0: #{tpu_custom_call.1}
  #allocation0 [shape = 'u32[]', space=smem, size = 0x4, offset = 0x4, fixed_abs, tag = 'smem constant byte address 0x4 - core index']
  #allocation1 [shape = 'u32[144,128]{1,0:T(1,128)}', space=vmem, size = 0x12000, scoped, tag = 'internal scratch']
  %s0 = inlined_call_operand.hbm [shape: f32[2,512], index: 0, kind: input, shape index: {}]
  %s1 = inlined_call_operand.hbm [shape: f32[1,512], index: 1, kind: input, shape index: {}]
  %s2 = inlined_call_operand.vmem [shape: f32[1,512], index: 2, kind: input, shape index: {}]
  %s3 = inlined_call_operand.hbm [shape: f32[512,512], index: 3, kind: input, shape index: {}]
  %s4 = inlined_call_operand.vmem [shape: f32[1,512], index: 4, kind: input, shape index: {}]
  %s5 = inlined_call_operand.hbm [shape: f32[2,512], index: 5, kind: output, shape index: {}]
  %s6 = sld [smem:[#allocation0]]
  $region42: #{tpu_custom_call.1} parent=0
    _
  %s8 = ssub.s32 1, %s6
  %s9 = scalar_select 0, %s8, %s6
  $region1: #{tpu_custom_call.1} parent=0
    #allocation2 [shape = 'u8[4096]{0}', space=vmem, size = 0x1000, scoped, tag = 'input window, operand 0, single buffered']
    #allocation3 [shape = 's32[1]{0}', space=sflag, size = 0x4, scoped, tag = 'scoped memory for tpu_custom_call.1']
    #allocation4 [shape = 's32[1]{0}', space=sflag, size = 0x4, scoped, tag = 'scoped memory for tpu_custom_call.1']
    #allocation5 [shape = 'u8[2048]{0}', space=vmem, size = 0x800, scoped, tag = 'input window, operand 1, single buffered']
    #allocation6 [shape = 's32[1]{0}', space=sflag, size = 0x4, scoped, tag = 'scoped memory for tpu_custom_call.1']
    #allocation7 [shape = 'u8[1048576]{0}', space=vmem, size = 0x100000, scoped, tag = 'input window, operand 3, single buffered']
    #allocation8 [shape = 'u8[4096]{0}', space=vmem, size = 0x1000, scoped, tag = 'output window, operand 0, single buffered']
    %10 = vsyncpa [#allocation3], 0
    %11 = vsyncpa [#allocation6], 0
    %12 = vsyncpa [#allocation4], 0
    // Predicated region
    $region2: #{tpu_custom_call.1} parent=1 // pred_check
      _
    $region3: #{tpu_custom_call.1} parent=1 // pred_check_branch
      %14 = sbr.rel (0) target = $region5
    $region4: #{tpu_custom_call.1} parent=1 // pred_region
      %s16 = ssub.s32 128, 128
      %17 = vsyncadd [#allocation3], %s16
      %s19 = sshll.u32 [#allocation2], 4
      %s20 = int_to_ptr.vmem [resolvable:$true] %s19
      %22 = dma.hbm_to_vmem [thread:$0]  %s0, 128, %s20, [#allocation3]
    $region5: #{tpu_custom_call.1} parent=1 // pred_fallthru
      _
    // Predicated region
    $region6: #{tpu_custom_call.1} parent=1 // pred_check
      _
    $region7: #{tpu_custom_call.1} parent=1 // pred_check_branch
      %24 = sbr.rel (0) target = $region9
    $region8: #{tpu_custom_call.1} parent=1 // pred_region
      %s26 = ssub.s32 64, 64
      %27 = vsyncadd [#allocation6], %s26
      %s29 = sshll.u32 [#allocation5], 4
      %s30 = int_to_ptr.vmem [resolvable:$true] %s29
      %32 = dma.hbm_to_vmem [thread:$0]  %s1, 64, %s30, [#allocation6]
    $region9: #{tpu_custom_call.1} parent=1 // pred_fallthru
      _
    // Predicated region
    $region10: #{tpu_custom_call.1} parent=1 // pred_check
      _
    $region11: #{tpu_custom_call.1} parent=1 // pred_check_branch
      %34 = sbr.rel (0) target = $region13
    $region12: #{tpu_custom_call.1} parent=1 // pred_region
      _
    $region13: #{tpu_custom_call.1} parent=1 // pred_fallthru
      _
    // Predicated region
    $region14: #{tpu_custom_call.1} parent=1 // pred_check
      _
    $region15: #{tpu_custom_call.1} parent=1 // pred_check_branch
      %36 = sbr.rel (0) target = $region17
    $region16: #{tpu_custom_call.1} parent=1 // pred_region
      %s38 = ssub.s32 32768, 32768
      %39 = vsyncadd [#allocation6], %s38
      %s40 = sshll.u32 [#allocation7], 4
      %s41 = int_to_ptr.vmem [resolvable:$true] %s40
      %46 = dma.hbm_to_vmem [thread:$0]  %s3, 32768, %s41, [#allocation6], 512, 512, 32
    $region17: #{tpu_custom_call.1} parent=1 // pred_fallthru
      _
    // Predicated region
    $region18: #{tpu_custom_call.1} parent=1 // pred_check
      _
    $region19: #{tpu_custom_call.1} parent=1 // pred_check_branch
      %48 = sbr.rel (0) target = $region21
    $region20: #{tpu_custom_call.1} parent=1 // pred_region
      _
    $region21: #{tpu_custom_call.1} parent=1 // pred_fallthru
      _
    // Predicated region
    $region22: #{tpu_custom_call.1} parent=1 // pred_check
      _
    $region23: #{tpu_custom_call.1} parent=1 // pred_check_branch
      %50 = sbr.rel (0) target = $region25
    $region24: #{tpu_custom_call.1} parent=1 // pred_region
      %51 = dma.done [#allocation3], 128
    $region25: #{tpu_custom_call.1} parent=1 // pred_fallthru
      _
    // Predicated region
    $region26: #{tpu_custom_call.1} parent=1 // pred_check
      _
    $region27: #{tpu_custom_call.1} parent=1 // pred_check_branch
      %53 = sbr.rel (0) target = $region29
    $region28: #{tpu_custom_call.1} parent=1 // pred_region
      %54 = dma.done [#allocation6], 64
    $region29: #{tpu_custom_call.1} parent=1 // pred_fallthru
      _
    // Predicated region
    $region30: #{tpu_custom_call.1} parent=1 // pred_check
      _
    $region31: #{tpu_custom_call.1} parent=1 // pred_check_branch
      %56 = sbr.rel (0) target = $region33
    $region32: #{tpu_custom_call.1} parent=1 // pred_region
      %57 = dma.done [#allocation6], 32768
    $region33: #{tpu_custom_call.1} parent=1 // pred_fallthru
      _
    %v58 = vld [vmem:[#allocation2] sm:$0xff]
    %v59 = vld [vmem:[#allocation5] sm:$0xf]
    %v60 = vld [vmem:[%s2] sm:$0xf]
    %v62 = vcombine.high %v58, %v58
    %v64 = vunpack.c.l.s4 1983009808
    %v65 = vunpack.c.0.s8 %v64
    %v66 = vlaneseq
    %v67 = vshrl.u32 %v66, 7
    %v68 = vsub.s32 %v65, %v67
    %v69 = vrot.slane %v58, %v68
    %v71 = vunpack.c.l.s4 1983009808
    %v72 = vunpack.c.0.s8 %v71
    %v73 = vlaneseq
    %v74 = vshrl.u32 %v73, 7
    %v75 = vsub.s32 %v72, %v74
    %v76 = vrot.slane %v62, %v75
    %v77 = vcombine.high %v69, %v69
    %v78 = vcombine.high %v76, %v76
    %vm83 = vcmask 1041408
    %v84 = vsel %vm83, %v69, 0.0
    %v85 = vsel %vm83, %v77, 0.0
    %v86 = vadd.f32 %v84, %v85
    %v87 = vsel %vm83, %v76, 0.0
    %v88 = vadd.f32 %v86, %v87
    %v89 = vsel %vm83, %v78, 0.0
    %v90 = vadd.f32 %v88, %v89
    %91 = vadd.xlane.f32.xlu0 %v90
    %v92 = vpop.xlane.xlu0 %91
    %v93 = vrcp.pop 512.0
    %v94 = vmul.f32 %v92, %v93
    %v97 = vunpack.c.l.s4 269488144
    %v98 = vunpack.c.0.s8 %v97
    %v99 = vlaneseq
    %v100 = vshrl.u32 %v99, 7
    %v101 = vsub.s32 %v98, %v100
    %v102 = vrot.slane %v94, %v101
    %v104 = vsub.f32 %v58, %v102
    %v105 = vmul.f32 %v104, %v104
    %v107 = vcombine.high %v105, %v105
    %v109 = vunpack.c.l.s4 1983009808
    %v110 = vunpack.c.0.s8 %v109
    %v111 = vlaneseq
    %v112 = vshrl.u32 %v111, 7
    %v113 = vsub.s32 %v110, %v112
    %v114 = vrot.slane %v105, %v113
    %v116 = vunpack.c.l.s4 1983009808
    %v117 = vunpack.c.0.s8 %v116
    %v118 = vlaneseq
    %v119 = vshrl.u32 %v118, 7
    %v120 = vsub.s32 %v117, %v119
    %v121 = vrot.slane %v107, %v120
    %v122 = vcombine.high %v114, %v114
    %v123 = vcombine.high %v121, %v121
    %v128 = vsel %vm83, %v114, 0.0
    %v129 = vsel %vm83, %v122, 0.0
    %v130 = vadd.f32 %v128, %v129
    %v131 = vsel %vm83, %v121, 0.0
    %v132 = vadd.f32 %v130, %v131
    %v133 = vsel %vm83, %v123, 0.0
    %v134 = vadd.f32 %v132, %v133
    %135 = vadd.xlane.f32.xlu0 %v134
    %v136 = vpop.xlane.xlu0 %135
    %v137 = vmul.f32 %v136, %v93
    %v138 = vadd.f32 %v137, 1e-05
    %v139 = vrsqrt.pop %v138
    %v142 = vunpack.c.l.s4 269488144
    %v143 = vunpack.c.0.s8 %v142
    %v144 = vlaneseq
    %v145 = vshrl.u32 %v144, 7
    %v146 = vsub.s32 %v143, %v145
    %v147 = vrot.slane %v139, %v146
    %v149 = vmul.f32 %v104, %v147
    %v151 = vlaneseq
    %v152 = vshrl.u32 %v151, 7
    %v153 = vsub.s32 0, %v152
    %v154 = vrot.slane %v59, %v153
    %v155 = vlaneseq
    %v156 = vshrl.u32 %v155, 7
    %v157 = vsub.s32 1, %v156
    %v158 = vrot.slane %v59, %v157
    %v159 = vlaneseq
    %v160 = vshrl.u32 %v159, 7
    %v161 = vsub.s32 2, %v160
    %v162 = vrot.slane %v59, %v161
    %v163 = vlaneseq
    %v164 = vshrl.u32 %v163, 7
    %v165 = vsub.s32 3, %v164
    %v166 = vrot.slane %v59, %v165
    %v167 = vcombine.low %v154, %v158
    %v168 = vcombine.low %v162, %v166
    %v170 = vunpack.c.l.s4 1983009808
    %v171 = vunpack.c.0.s8 %v170
    %v172 = vlaneseq
    %v173 = vshrl.u32 %v172, 7
    %v174 = vsub.s32 %v171, %v173
    %v175 = vrot.slane %v167, %v174
    %v177 = vunpack.c.l.s4 1983009808
    %v178 = vunpack.c.0.s8 %v177
    %v179 = vlaneseq
    %v180 = vshrl.u32 %v179, 7
    %v181 = vsub.s32 %v178, %v180
    %v182 = vrot.slane %v168, %v181
    %v183 = vcombine.low %v175, %v182
    %v185 = vmul.f32 %v149, %v183
    %v187 = vlaneseq
    %v188 = vshrl.u32 %v187, 7
    %v189 = vsub.s32 0, %v188
    %v190 = vrot.slane %v60, %v189
    %v191 = vlaneseq
    %v192 = vshrl.u32 %v191, 7
    %v193 = vsub.s32 1, %v192
    %v194 = vrot.slane %v60, %v193
    %v195 = vlaneseq
    %v196 = vshrl.u32 %v195, 7
    %v197 = vsub.s32 2, %v196
    %v198 = vrot.slane %v60, %v197
    %v199 = vlaneseq
    %v200 = vshrl.u32 %v199, 7
    %v201 = vsub.s32 3, %v200
    %v202 = vrot.slane %v60, %v201
    %v203 = vcombine.low %v190, %v194
    %v204 = vcombine.low %v198, %v202
    %v206 = vunpack.c.l.s4 1983009808
    %v207 = vunpack.c.0.s8 %v206
    %v208 = vlaneseq
    %v209 = vshrl.u32 %v208, 7
    %v210 = vsub.s32 %v207, %v209
    %v211 = vrot.slane %v203, %v210
    %v213 = vunpack.c.l.s4 1983009808
    %v214 = vunpack.c.0.s8 %v213
    %v215 = vlaneseq
    %v216 = vshrl.u32 %v215, 7
    %v217 = vsub.s32 %v214, %v216
    %v218 = vrot.slane %v204, %v217
    %v219 = vcombine.low %v211, %v218
    %v221 = vadd.f32 %v185, %v219
    %v222 = vld [vmem:[#allocation7] sm:$0xff]
    %v223 = vld [vmem:[#allocation7 + $0x8] sm:$0xff]
    %v224 = vld [vmem:[#allocation7 + $0x10] sm:$0xff]
    %v225 = vld [vmem:[#allocation7 + $0x18] sm:$0xff]
    %v226 = vld [vmem:[#allocation7 + $0x20] sm:$0xff]
    %v227 = vld [vmem:[#allocation7 + $0x28] sm:$0xff]
    %v228 = vld [vmem:[#allocation7 + $0x30] sm:$0xff]
    %v229 = vld [vmem:[#allocation7 + $0x38] sm:$0xff]
    %v230 = vld [vmem:[#allocation7 + $0x40] sm:$0xff]
    %v231 = vld [vmem:[#allocation7 + $0x48] sm:$0xff]
    %v232 = vld [vmem:[#allocation7 + $0x50] sm:$0xff]
    %v233 = vld [vmem:[#allocation7 + $0x58] sm:$0xff]
    %v234 = vld [vmem:[#allocation7 + $0x60] sm:$0xff]
    %v235 = vld [vmem:[#allocation7 + $0x68] sm:$0xff]
    %v236 = vld [vmem:[#allocation7 + $0x70] sm:$0xff]
    %v237 = vld [vmem:[#allocation7 + $0x78] sm:$0xff]
    %v238 = vld [vmem:[#allocation7 + $0x80] sm:$0xff]
    %v239 = vld [vmem:[#allocation7 + $0x88] sm:$0xff]
    %v240 = vld [vmem:[#allocation7 + $0x90] sm:$0xff]
    %v241 = vld [vmem:[#allocation7 + $0x98] sm:$0xff]
    %v242 = vld [vmem:[#allocation7 + $0xa0] sm:$0xff]
    %v243 = vld [vmem:[#allocation7 + $0xa8] sm:$0xff]
    %v244 = vld [vmem:[#allocation7 + $0xb0] sm:$0xff]
    %v245 = vld [vmem:[#allocation7 + $0xb8] sm:$0xff]
    %v246 = vld [vmem:[#allocation7 + $0xc0] sm:$0xff]
    %v247 = vld [vmem:[#allocation7 + $0xc8] sm:$0xff]
    %v248 = vld [vmem:[#allocation7 + $0xd0] sm:$0xff]
    %v249 = vld [vmem:[#allocation7 + $0xd8] sm:$0xff]
    %v250 = vld [vmem:[#allocation7 + $0xe0] sm:$0xff]
    %v251 = vld [vmem:[#allocation7 + $0xe8] sm:$0xff]
    %v252 = vld [vmem:[#allocation7 + $0xf0] sm:$0xff]
    %v253 = vld [vmem:[#allocation7 + $0xf8] sm:$0xff]
    %v254 = vld [vmem:[#allocation7 + $0x100] sm:$0xff]
    %v255 = vld [vmem:[#allocation7 + $0x108] sm:$0xff]
    %v256 = vld [vmem:[#allocation7 + $0x110] sm:$0xff]
    %v257 = vld [vmem:[#allocation7 + $0x118] sm:$0xff]
    %v258 = vld [vmem:[#allocation7 + $0x120] sm:$0xff]
    %v259 = vld [vmem:[#allocation7 + $0x128] sm:$0xff]
    %v260 = vld [vmem:[#allocation7 + $0x130] sm:$0xff]
    %v261 = vld [vmem:[#allocation7 + $0x138] sm:$0xff]
    %v262 = vld [vmem:[#allocation7 + $0x140] sm:$0xff]
    %v263 = vld [vmem:[#allocation7 + $0x148] sm:$0xff]
    %v264 = vld [vmem:[#allocation7 + $0x150] sm:$0xff]
    %v265 = vld [vmem:[#allocation7 + $0x158] sm:$0xff]
    %v266 = vld [vmem:[#allocation7 + $0x160] sm:$0xff]
    %v267 = vld [vmem:[#allocation7 + $0x168] sm:$0xff]
    %v268 = vld [vmem:[#allocation7 + $0x170] sm:$0xff]
    %v269 = vld [vmem:[#allocation7 + $0x178] sm:$0xff]
    %v270 = vld [vmem:[#allocation7 + $0x180] sm:$0xff]
    %v271 = vld [vmem:[#allocation7 + $0x188] sm:$0xff]
    %v272 = vld [vmem:[#allocation7 + $0x190] sm:$0xff]
    %v273 = vld [vmem:[#allocation7 + $0x198] sm:$0xff]
    %v274 = vld [vmem:[#allocation7 + $0x1a0] sm:$0xff]
    %v275 = vld [vmem:[#allocation7 + $0x1a8] sm:$0xff]
    %v276 = vld [vmem:[#allocation7 + $0x1b0] sm:$0xff]
    %v277 = vld [vmem:[#allocation7 + $0x1b8] sm:$0xff]
    %v278 = vld [vmem:[#allocation7 + $0x1c0] sm:$0xff]
    %v279 = vld [vmem:[#allocation7 + $0x1c8] sm:$0xff]
    %v280 = vld [vmem:[#allocation7 + $0x1d0] sm:$0xff]
    %v281 = vld [vmem:[#allocation7 + $0x1d8] sm:$0xff]
    %v282 = vld [vmem:[#allocation7 + $0x1e0] sm:$0xff]
    %v283 = vld [vmem:[#allocation7 + $0x1e8] sm:$0xff]
    %v284 = vld [vmem:[#allocation7 + $0x1f0] sm:$0xff]
    %v285 = vld [vmem:[#allocation7 + $0x1f8] sm:$0xff]
    %v286 = vld [vmem:[#allocation7 + $0x200] sm:$0xff]
    %v287 = vld [vmem:[#allocation7 + $0x208] sm:$0xff]
    %v288 = vld [vmem:[#allocation7 + $0x210] sm:$0xff]
    %v289 = vld [vmem:[#allocation7 + $0x218] sm:$0xff]
    %v290 = vld [vmem:[#allocation7 + $0x220] sm:$0xff]
    %v291 = vld [vmem:[#allocation7 + $0x228] sm:$0xff]
    %v292 = vld [vmem:[#allocation7 + $0x230] sm:$0xff]
    %v293 = vld [vmem:[#allocation7 + $0x238] sm:$0xff]
    %v294 = vld [vmem:[#allocation7 + $0x240] sm:$0xff]
    %v295 = vld [vmem:[#allocation7 + $0x248] sm:$0xff]
    %v296 = vld [vmem:[#allocation7 + $0x250] sm:$0xff]
    %v297 = vld [vmem:[#allocation7 + $0x258] sm:$0xff]
    %v298 = vld [vmem:[#allocation7 + $0x260] sm:$0xff]
    %v299 = vld [vmem:[#allocation7 + $0x268] sm:$0xff]
    %v300 = vld [vmem:[#allocation7 + $0x270] sm:$0xff]
    %v301 = vld [vmem:[#allocation7 + $0x278] sm:$0xff]
    %v302 = vld [vmem:[#allocation7 + $0x280] sm:$0xff]
    %v303 = vld [vmem:[#allocation7 + $0x288] sm:$0xff]
    %v304 = vld [vmem:[#allocation7 + $0x290] sm:$0xff]
    %v305 = vld [vmem:[#allocation7 + $0x298] sm:$0xff]
    %v306 = vld [vmem:[#allocation7 + $0x2a0] sm:$0xff]
    %v307 = vld [vmem:[#allocation7 + $0x2a8] sm:$0xff]
    %v308 = vld [vmem:[#allocation7 + $0x2b0] sm:$0xff]
    %v309 = vld [vmem:[#allocation7 + $0x2b8] sm:$0xff]
    %v310 = vld [vmem:[#allocation7 + $0x2c0] sm:$0xff]
    %v311 = vld [vmem:[#allocation7 + $0x2c8] sm:$0xff]
    %v312 = vld [vmem:[#allocation7 + $0x2d0] sm:$0xff]
    %v313 = vld [vmem:[#allocation7 + $0x2d8] sm:$0xff]
    %v314 = vld [vmem:[#allocation7 + $0x2e0] sm:$0xff]
    %v315 = vld [vmem:[#allocation7 + $0x2e8] sm:$0xff]
    %v316 = vld [vmem:[#allocation7 + $0x2f0] sm:$0xff]
    %v317 = vld [vmem:[#allocation7 + $0x2f8] sm:$0xff]
    %v318 = vld [vmem:[#allocation7 + $0x300] sm:$0xff]
    %v319 = vld [vmem:[#allocation7 + $0x308] sm:$0xff]
    %v320 = vld [vmem:[#allocation7 + $0x310] sm:$0xff]
    %v321 = vld [vmem:[#allocation7 + $0x318] sm:$0xff]
    %v322 = vld [vmem:[#allocation7 + $0x320] sm:$0xff]
    %v323 = vld [vmem:[#allocation7 + $0x328] sm:$0xff]
    %v324 = vld [vmem:[#allocation7 + $0x330] sm:$0xff]
    %v325 = vld [vmem:[#allocation7 + $0x338] sm:$0xff]
    %v326 = vld [vmem:[#allocation7 + $0x340] sm:$0xff]
    %v327 = vld [vmem:[#allocation7 + $0x348] sm:$0xff]
    %v328 = vld [vmem:[#allocation7 + $0x350] sm:$0xff]
    %v329 = vld [vmem:[#allocation7 + $0x358] sm:$0xff]
    %v330 = vld [vmem:[#allocation7 + $0x360] sm:$0xff]
    %v331 = vld [vmem:[#allocation7 + $0x368] sm:$0xff]
    %v332 = vld [vmem:[#allocation7 + $0x370] sm:$0xff]
    %v333 = vld [vmem:[#allocation7 + $0x378] sm:$0xff]
    %v334 = vld [vmem:[#allocation7 + $0x380] sm:$0xff]
    %v335 = vld [vmem:[#allocation7 + $0x388] sm:$0xff]
    %v336 = vld [vmem:[#allocation7 + $0x390] sm:$0xff]
    %v337 = vld [vmem:[#allocation7 + $0x398] sm:$0xff]
    %v338 = vld [vmem:[#allocation7 + $0x3a0] sm:$0xff]
    %v339 = vld [vmem:[#allocation7 + $0x3a8] sm:$0xff]
    %v340 = vld [vmem:[#allocation7 + $0x3b0] sm:$0xff]
    %v341 = vld [vmem:[#allocation7 + $0x3b8] sm:$0xff]
    %v342 = vld [vmem:[#allocation7 + $0x3c0] sm:$0xff]
    %v343 = vld [vmem:[#allocation7 + $0x3c8] sm:$0xff]
    %v344 = vld [vmem:[#allocation7 + $0x3d0] sm:$0xff]
    %v345 = vld [vmem:[#allocation7 + $0x3d8] sm:$0xff]
    %v346 = vld [vmem:[#allocation7 + $0x3e0] sm:$0xff]
    %v347 = vld [vmem:[#allocation7 + $0x3e8] sm:$0xff]
    %v348 = vld [vmem:[#allocation7 + $0x3f0] sm:$0xff]
    %v349 = vld [vmem:[#allocation7 + $0x3f8] sm:$0xff]
    %v350 = vld [vmem:[#allocation7 + $0x400] sm:$0xff]
    %v351 = vld [vmem:[#allocation7 + $0x408] sm:$0xff]
    %v352 = vld [vmem:[#allocation7 + $0x410] sm:$0xff]
    %v353 = vld [vmem:[#allocation7 + $0x418] sm:$0xff]
    %v354 = vld [vmem:[#allocation7 + $0x420] sm:$0xff]
    %v355 = vld [vmem:[#allocation7 + $0x428] sm:$0xff]
    %v356 = vld [vmem:[#allocation7 + $0x430] sm:$0xff]
    %v357 = vld [vmem:[#allocation7 + $0x438] sm:$0xff]
    %v358 = vld [vmem:[#allocation7 + $0x440] sm:$0xff]
    %v359 = vld [vmem:[#allocation7 + $0x448] sm:$0xff]
    %v360 = vld [vmem:[#allocation7 + $0x450] sm:$0xff]
    %v361 = vld [vmem:[#allocation7 + $0x458] sm:$0xff]
    %v362 = vld [vmem:[#allocation7 + $0x460] sm:$0xff]
    %v363 = vld [vmem:[#allocation7 + $0x468] sm:$0xff]
    %v364 = vld [vmem:[#allocation7 + $0x470] sm:$0xff]
    %v365 = vld [vmem:[#allocation7 + $0x478] sm:$0xff]
    %v366 = vld [vmem:[#allocation7 + $0x480] sm:$0xff]
    %v367 = vld [vmem:[#allocation7 + $0x488] sm:$0xff]
    %v368 = vld [vmem:[#allocation7 + $0x490] sm:$0xff]
    %v369 = vld [vmem:[#allocation7 + $0x498] sm:$0xff]
    %v370 = vld [vmem:[#allocation7 + $0x4a0] sm:$0xff]
    %v371 = vld [vmem:[#allocation7 + $0x4a8] sm:$0xff]
    %v372 = vld [vmem:[#allocation7 + $0x4b0] sm:$0xff]
    %v373 = vld [vmem:[#allocation7 + $0x4b8] sm:$0xff]
    %v374 = vld [vmem:[#allocation7 + $0x4c0] sm:$0xff]
    %v375 = vld [vmem:[#allocation7 + $0x4c8] sm:$0xff]
    %v376 = vld [vmem:[#allocation7 + $0x4d0] sm:$0xff]
    %v377 = vld [vmem:[#allocation7 + $0x4d8] sm:$0xff]
    %v378 = vld [vmem:[#allocation7 + $0x4e0] sm:$0xff]
    %v379 = vld [vmem:[#allocation7 + $0x4e8] sm:$0xff]
    %v380 = vld [vmem:[#allocation7 + $0x4f0] sm:$0xff]
    %v381 = vld [vmem:[#allocation7 + $0x4f8] sm:$0xff]
    %v382 = vld [vmem:[#allocation7 + $0x500] sm:$0xff]
    %v383 = vld [vmem:[#allocation7 + $0x508] sm:$0xff]
    %v384 = vld [vmem:[#allocation7 + $0x510] sm:$0xff]
    %v385 = vld [vmem:[#allocation7 + $0x518] sm:$0xff]
    %v386 = vld [vmem:[#allocation7 + $0x520] sm:$0xff]
    %v387 = vld [vmem:[#allocation7 + $0x528] sm:$0xff]
    %v388 = vld [vmem:[#allocation7 + $0x530] sm:$0xff]
    %v389 = vld [vmem:[#allocation7 + $0x538] sm:$0xff]
    %v390 = vld [vmem:[#allocation7 + $0x540] sm:$0xff]
    %v391 = vld [vmem:[#allocation7 + $0x548] sm:$0xff]
    %v392 = vld [vmem:[#allocation7 + $0x550] sm:$0xff]
    %v393 = vld [vmem:[#allocation7 + $0x558] sm:$0xff]
    %v394 = vld [vmem:[#allocation7 + $0x560] sm:$0xff]
    %v395 = vld [vmem:[#allocation7 + $0x568] sm:$0xff]
    %v396 = vld [vmem:[#allocation7 + $0x570] sm:$0xff]
    %v397 = vld [vmem:[#allocation7 + $0x578] sm:$0xff]
    %v398 = vld [vmem:[#allocation7 + $0x580] sm:$0xff]
    %v399 = vld [vmem:[#allocation7 + $0x588] sm:$0xff]
    %v400 = vld [vmem:[#allocation7 + $0x590] sm:$0xff]
    %v401 = vld [vmem:[#allocation7 + $0x598] sm:$0xff]
    %v402 = vld [vmem:[#allocation7 + $0x5a0] sm:$0xff]
    %v403 = vld [vmem:[#allocation7 + $0x5a8] sm:$0xff]
    %v404 = vld [vmem:[#allocation7 + $0x5b0] sm:$0xff]
    %v405 = vld [vmem:[#allocation7 + $0x5b8] sm:$0xff]
    %v406 = vld [vmem:[#allocation7 + $0x5c0] sm:$0xff]
    %v407 = vld [vmem:[#allocation7 + $0x5c8] sm:$0xff]
    %v408 = vld [vmem:[#allocation7 + $0x5d0] sm:$0xff]
    %v409 = vld [vmem:[#allocation7 + $0x5d8] sm:$0xff]
    %v410 = vld [vmem:[#allocation7 + $0x5e0] sm:$0xff]
    %v411 = vld [vmem:[#allocation7 + $0x5e8] sm:$0xff]
    %v412 = vld [vmem:[#allocation7 + $0x5f0] sm:$0xff]
    %v413 = vld [vmem:[#allocation7 + $0x5f8] sm:$0xff]
    %v414 = vld [vmem:[#allocation7 + $0x600] sm:$0xff]
    %v415 = vld [vmem:[#allocation7 + $0x608] sm:$0xff]
    %v416 = vld [vmem:[#allocation7 + $0x610] sm:$0xff]
    %v417 = vld [vmem:[#allocation7 + $0x618] sm:$0xff]
    %v418 = vld [vmem:[#allocation7 + $0x620] sm:$0xff]
    %v419 = vld [vmem:[#allocation7 + $0x628] sm:$0xff]
    %v420 = vld [vmem:[#allocation7 + $0x630] sm:$0xff]
    %v421 = vld [vmem:[#allocation7 + $0x638] sm:$0xff]
    %v422 = vld [vmem:[#allocation7 + $0x640] sm:$0xff]
    %v423 = vld [vmem:[#allocation7 + $0x648] sm:$0xff]
    %v424 = vld [vmem:[#allocation7 + $0x650] sm:$0xff]
    %v425 = vld [vmem:[#allocation7 + $0x658] sm:$0xff]
    %v426 = vld [vmem:[#allocation7 + $0x660] sm:$0xff]
    %v427 = vld [vmem:[#allocation7 + $0x668] sm:$0xff]
    %v428 = vld [vmem:[#allocation7 + $0x670] sm:$0xff]
    %v429 = vld [vmem:[#allocation7 + $0x678] sm:$0xff]
    %v430 = vld [vmem:[#allocation7 + $0x680] sm:$0xff]
    %v431 = vld [vmem:[#allocation7 + $0x688] sm:$0xff]
    %v432 = vld [vmem:[#allocation7 + $0x690] sm:$0xff]
    %v433 = vld [vmem:[#allocation7 + $0x698] sm:$0xff]
    %v434 = vld [vmem:[#allocation7 + $0x6a0] sm:$0xff]
    %v435 = vld [vmem:[#allocation7 + $0x6a8] sm:$0xff]
    %v436 = vld [vmem:[#allocation7 + $0x6b0] sm:$0xff]
    %v437 = vld [vmem:[#allocation7 + $0x6b8] sm:$0xff]
    %v438 = vld [vmem:[#allocation7 + $0x6c0] sm:$0xff]
    %v439 = vld [vmem:[#allocation7 + $0x6c8] sm:$0xff]
    %v440 = vld [vmem:[#allocation7 + $0x6d0] sm:$0xff]
    %v441 = vld [vmem:[#allocation7 + $0x6d8] sm:$0xff]
    %v442 = vld [vmem:[#allocation7 + $0x6e0] sm:$0xff]
    %v443 = vld [vmem:[#allocation7 + $0x6e8] sm:$0xff]
    %v444 = vld [vmem:[#allocation7 + $0x6f0] sm:$0xff]
    %v445 = vld [vmem:[#allocation7 + $0x6f8] sm:$0xff]
    %v446 = vld [vmem:[#allocation7 + $0x700] sm:$0xff]
    %v447 = vld [vmem:[#allocation7 + $0x708] sm:$0xff]
    %v448 = vld [vmem:[#allocation7 + $0x710] sm:$0xff]
    %v449 = vld [vmem:[#allocation7 + $0x718] sm:$0xff]
    %v450 = vld [vmem:[#allocation7 + $0x720] sm:$0xff]
    %v451 = vld [vmem:[#allocation7 + $0x728] sm:$0xff]
    %v452 = vld [vmem:[#allocation7 + $0x730] sm:$0xff]
    %v453 = vld [vmem:[#allocation7 + $0x738] sm:$0xff]
    %v454 = vld [vmem:[#allocation7 + $0x740] sm:$0xff]
    %v455 = vld [vmem:[#allocation7 + $0x748] sm:$0xff]
    %v456 = vld [vmem:[#allocation7 + $0x750] sm:$0xff]
    %v457 = vld [vmem:[#allocation7 + $0x758] sm:$0xff]
    %v458 = vld [vmem:[#allocation7 + $0x760] sm:$0xff]
    %v459 = vld [vmem:[#allocation7 + $0x768] sm:$0xff]
    %v460 = vld [vmem:[#allocation7 + $0x770] sm:$0xff]
    %v461 = vld [vmem:[#allocation7 + $0x778] sm:$0xff]
    %v462 = vld [vmem:[#allocation7 + $0x780] sm:$0xff]
    %v463 = vld [vmem:[#allocation7 + $0x788] sm:$0xff]
    %v464 = vld [vmem:[#allocation7 + $0x790] sm:$0xff]
    %v465 = vld [vmem:[#allocation7 + $0x798] sm:$0xff]
    %v466 = vld [vmem:[#allocation7 + $0x7a0] sm:$0xff]
    %v467 = vld [vmem:[#allocation7 + $0x7a8] sm:$0xff]
    %v468 = vld [vmem:[#allocation7 + $0x7b0] sm:$0xff]
    %v469 = vld [vmem:[#allocation7 + $0x7b8] sm:$0xff]
    %v470 = vld [vmem:[#allocation7 + $0x7c0] sm:$0xff]
    %v471 = vld [vmem:[#allocation7 + $0x7c8] sm:$0xff]
    %v472 = vld [vmem:[#allocation7 + $0x7d0] sm:$0xff]
    %v473 = vld [vmem:[#allocation7 + $0x7d8] sm:$0xff]
    %v474 = vld [vmem:[#allocation7 + $0x7e0] sm:$0xff]
    %v475 = vld [vmem:[#allocation7 + $0x7e8] sm:$0xff]
    %v476 = vld [vmem:[#allocation7 + $0x7f0] sm:$0xff]
    %v477 = vld [vmem:[#allocation7 + $0x7f8] sm:$0xff]
    %v478 = vld [vmem:[%s4] sm:$0xf]
    %v480 = vlaneseq
    %v481 = vshrl.u32 %v480, 7
    %v482 = vsub.s32 0, %v481
    %v483 = vrot.slane %v478, %v482
    %v484 = vlaneseq
    %v485 = vshrl.u32 %v484, 7
    %v486 = vsub.s32 1, %v485
    %v487 = vrot.slane %v478, %v486
    %v488 = vlaneseq
    %v489 = vshrl.u32 %v488, 7
    %v490 = vsub.s32 2, %v489
    %v491 = vrot.slane %v478, %v490
    %v492 = vlaneseq
    %v493 = vshrl.u32 %v492, 7
    %v494 = vsub.s32 3, %v493
    %v495 = vrot.slane %v478, %v494
    %v501 = vcombine.high %v221, %v221
    %v503 = vunpack.c.l.s4 1983009808
    %v504 = vunpack.c.0.s8 %v503
    %v505 = vlaneseq
    %v506 = vshrl.u32 %v505, 7
    %v507 = vsub.s32 %v504, %v506
    %v508 = vrot.slane %v221, %v507
    %v510 = vunpack.c.l.s4 1983009808
    %v511 = vunpack.c.0.s8 %v510
    %v512 = vlaneseq
    %v513 = vshrl.u32 %v512, 7
    %v514 = vsub.s32 %v511, %v513
    %v515 = vrot.slane %v501, %v514
    %v516 = vcombine.high %v508, %v508
    %v517 = vcombine.high %v515, %v515
    %522 = vmatprep.subr.mxu0 %v223
    %523 = vmatpush1.msra.mxu0 %v222
    %524 = vmatprep.subr.mxu0 %v227
    %525 = vmatpush1.msra.mxu0 %v226
    %526 = vmatprep.subr.mxu0 %v231
    %527 = vmatpush1.msra.mxu0 %v230
    %528 = vmatprep.subr.mxu0 %v235
    %529 = vmatpush1.msra.mxu0 %v234
    %530 = vmatprep.subr.mxu0 %v239
    %531 = vmatpush1.msra.mxu0 %v238
    %532 = vmatprep.subr.mxu0 %v243
    %533 = vmatpush1.msra.mxu0 %v242
    %534 = vmatprep.subr.mxu0 %v247
    %535 = vmatpush1.msra.mxu0 %v246
    %536 = vmatprep.subr.mxu0 %v251
    %537 = vmatpush1.msra.mxu0 %v250
    %538 = vmatprep.subr.mxu0 %v255
    %539 = vmatpush1.msra.mxu0 %v254
    %540 = vmatprep.subr.mxu0 %v259
    %541 = vmatpush1.msra.mxu0 %v258
    %542 = vmatprep.subr.mxu0 %v263
    %543 = vmatpush1.msra.mxu0 %v262
    %544 = vmatprep.subr.mxu0 %v267
    %545 = vmatpush1.msra.mxu0 %v266
    %546 = vmatprep.subr.mxu0 %v271
    %547 = vmatpush1.msra.mxu0 %v270
    %548 = vmatprep.subr.mxu0 %v275
    %549 = vmatpush1.msra.mxu0 %v274
    %550 = vmatprep.subr.mxu0 %v279
    %551 = vmatpush1.msra.mxu0 %v278
    %552 = vmatprep.subr.mxu0 %v283
    %553 = vmatpush1.msra.mxu0 %v282
    %554 = vmatprep.subr.mxu0 %v287
    %555 = vmatpush1.msra.mxu0 %v286
    %556 = vmatprep.subr.mxu0 %v291
    %557 = vmatpush1.msra.mxu0 %v290
    %558 = vmatprep.subr.mxu0 %v295
    %559 = vmatpush1.msra.mxu0 %v294
    %560 = vmatprep.subr.mxu0 %v299
    %561 = vmatpush1.msra.mxu0 %v298
    %562 = vmatprep.subr.mxu0 %v303
    %563 = vmatpush1.msra.mxu0 %v302
    %564 = vmatprep.subr.mxu0 %v307
    %565 = vmatpush1.msra.mxu0 %v306
    %566 = vmatprep.subr.mxu0 %v311
    %567 = vmatpush1.msra.mxu0 %v310
    %568 = vmatprep.subr.mxu0 %v315
    %569 = vmatpush1.msra.mxu0 %v314
    %570 = vmatprep.subr.mxu0 %v319
    %571 = vmatpush1.msra.mxu0 %v318
    %572 = vmatprep.subr.mxu0 %v323
    %573 = vmatpush1.msra.mxu0 %v322
    %574 = vmatprep.subr.mxu0 %v327
    %575 = vmatpush1.msra.mxu0 %v326
    %576 = vmatprep.subr.mxu0 %v331
    %577 = vmatpush1.msra.mxu0 %v330
    %578 = vmatprep.subr.mxu0 %v335
    %579 = vmatpush1.msra.mxu0 %v334
    %580 = vmatprep.subr.mxu0 %v339
    %581 = vmatpush1.msra.mxu0 %v338
    %582 = vmatprep.subr.mxu0 %v343
    %583 = vmatpush1.msra.mxu0 %v342
    %584 = vmatprep.subr.mxu0 %v347
    %585 = vmatpush1.msra.mxu0 %v346
    %586 = vmatprep.mubr.f32.mxu0 %v516
    %587 = vmatmul.mubr.f32.gmra.mrb[0].mxu0 %v508
    %v588 = vpop.f32.mrb[0].mxu0
    %v589 = vadd.f32 %v483, %v588
    %v590 = vpop.f32.mrb[0].mxu0
    %v591 = vadd.f32 %v487, %v590
    %592 = vdwg.mxu0
    %593 = vmatprep.subr.mxu0 %v351
    %594 = vmatpush1.msra.mxu0 %v350
    %595 = vmatprep.subr.mxu0 %v355
    %596 = vmatpush1.msra.mxu0 %v354
    %597 = vmatprep.subr.mxu0 %v359
    %598 = vmatpush1.msra.mxu0 %v358
    %599 = vmatprep.subr.mxu0 %v363
    %600 = vmatpush1.msra.mxu0 %v362
    %601 = vmatprep.subr.mxu0 %v367
    %602 = vmatpush1.msra.mxu0 %v366
    %603 = vmatprep.subr.mxu0 %v371
    %604 = vmatpush1.msra.mxu0 %v370
    %605 = vmatprep.subr.mxu0 %v375
    %606 = vmatpush1.msra.mxu0 %v374
    %607 = vmatprep.subr.mxu0 %v379
    %608 = vmatpush1.msra.mxu0 %v378
    %609 = vmatprep.subr.mxu0 %v383
    %610 = vmatpush1.msra.mxu0 %v382
    %611 = vmatprep.subr.mxu0 %v387
    %612 = vmatpush1.msra.mxu0 %v386
    %613 = vmatprep.subr.mxu0 %v391
    %614 = vmatpush1.msra.mxu0 %v390
    %615 = vmatprep.subr.mxu0 %v395
    %616 = vmatpush1.msra.mxu0 %v394
    %617 = vmatprep.subr.mxu0 %v399
    %618 = vmatpush1.msra.mxu0 %v398
    %619 = vmatprep.subr.mxu0 %v403
    %620 = vmatpush1.msra.mxu0 %v402
    %621 = vmatprep.subr.mxu0 %v407
    %622 = vmatpush1.msra.mxu0 %v406
    %623 = vmatprep.subr.mxu0 %v411
    %624 = vmatpush1.msra.mxu0 %v410
    %625 = vmatprep.subr.mxu0 %v415
    %626 = vmatpush1.msra.mxu0 %v414
    %627 = vmatprep.subr.mxu0 %v419
    %628 = vmatpush1.msra.mxu0 %v418
    %629 = vmatprep.subr.mxu0 %v423
    %630 = vmatpush1.msra.mxu0 %v422
    %631 = vmatprep.subr.mxu0 %v427
    %632 = vmatpush1.msra.mxu0 %v426
    %633 = vmatprep.subr.mxu0 %v431
    %634 = vmatpush1.msra.mxu0 %v430
    %635 = vmatprep.subr.mxu0 %v435
    %636 = vmatpush1.msra.mxu0 %v434
    %637 = vmatprep.subr.mxu0 %v439
    %638 = vmatpush1.msra.mxu0 %v438
    %639 = vmatprep.subr.mxu0 %v443
    %640 = vmatpush1.msra.mxu0 %v442
    %641 = vmatprep.subr.mxu0 %v447
    %642 = vmatpush1.msra.mxu0 %v446
    %643 = vmatprep.subr.mxu0 %v451
    %644 = vmatpush1.msra.mxu0 %v450
    %645 = vmatprep.subr.mxu0 %v455
    %646 = vmatpush1.msra.mxu0 %v454
    %647 = vmatprep.subr.mxu0 %v459
    %648 = vmatpush1.msra.mxu0 %v458
    %649 = vmatprep.subr.mxu0 %v463
    %650 = vmatpush1.msra.mxu0 %v462
    %651 = vmatprep.subr.mxu0 %v467
    %652 = vmatpush1.msra.mxu0 %v466
    %653 = vmatprep.subr.mxu0 %v471
    %654 = vmatpush1.msra.mxu0 %v470
    %655 = vmatprep.subr.mxu0 %v475
    %656 = vmatpush1.msra.mxu0 %v474
    %657 = vmatprep.mubr.f32.mxu0 %v517
    %658 = vmatmul.mubr.f32.gmra.mrb[0].mxu0 %v515
    %v659 = vpop.f32.mrb[0].mxu0
    %v660 = vadd.f32 %v589, %v659
    %v661 = vpop.f32.mrb[0].mxu0
    %v662 = vadd.f32 %v591, %v661
    %663 = vdwg.mxu0
    %664 = vmatprep.subr.mxu0 %v225
    %665 = vmatpush1.msra.mxu0 %v224
    %666 = vmatprep.subr.mxu0 %v229
    %667 = vmatpush1.msra.mxu0 %v228
    %668 = vmatprep.subr.mxu0 %v233
    %669 = vmatpush1.msra.mxu0 %v232
    %670 = vmatprep.subr.mxu0 %v237
    %671 = vmatpush1.msra.mxu0 %v236
    %672 = vmatprep.subr.mxu0 %v241
    %673 = vmatpush1.msra.mxu0 %v240
    %674 = vmatprep.subr.mxu0 %v245
    %675 = vmatpush1.msra.mxu0 %v244
    %676 = vmatprep.subr.mxu0 %v249
    %677 = vmatpush1.msra.mxu0 %v248
    %678 = vmatprep.subr.mxu0 %v253
    %679 = vmatpush1.msra.mxu0 %v252
    %680 = vmatprep.subr.mxu0 %v257
    %681 = vmatpush1.msra.mxu0 %v256
    %682 = vmatprep.subr.mxu0 %v261
    %683 = vmatpush1.msra.mxu0 %v260
    %684 = vmatprep.subr.mxu0 %v265
    %685 = vmatpush1.msra.mxu0 %v264
    %686 = vmatprep.subr.mxu0 %v269
    %687 = vmatpush1.msra.mxu0 %v268
    %688 = vmatprep.subr.mxu0 %v273
    %689 = vmatpush1.msra.mxu0 %v272
    %690 = vmatprep.subr.mxu0 %v277
    %691 = vmatpush1.msra.mxu0 %v276
    %692 = vmatprep.subr.mxu0 %v281
    %693 = vmatpush1.msra.mxu0 %v280
    %694 = vmatprep.subr.mxu0 %v285
    %695 = vmatpush1.msra.mxu0 %v284
    %696 = vmatprep.subr.mxu0 %v289
    %697 = vmatpush1.msra.mxu0 %v288
    %698 = vmatprep.subr.mxu0 %v293
    %699 = vmatpush1.msra.mxu0 %v292
    %700 = vmatprep.subr.mxu0 %v297
    %701 = vmatpush1.msra.mxu0 %v296
    %702 = vmatprep.subr.mxu0 %v301
    %703 = vmatpush1.msra.mxu0 %v300
    %704 = vmatprep.subr.mxu0 %v305
    %705 = vmatpush1.msra.mxu0 %v304
    %706 = vmatprep.subr.mxu0 %v309
    %707 = vmatpush1.msra.mxu0 %v308
    %708 = vmatprep.subr.mxu0 %v313
    %709 = vmatpush1.msra.mxu0 %v312
    %710 = vmatprep.subr.mxu0 %v317
    %711 = vmatpush1.msra.mxu0 %v316
    %712 = vmatprep.subr.mxu0 %v321
    %713 = vmatpush1.msra.mxu0 %v320
    %714 = vmatprep.subr.mxu0 %v325
    %715 = vmatpush1.msra.mxu0 %v324
    %716 = vmatprep.subr.mxu0 %v329
    %717 = vmatpush1.msra.mxu0 %v328
    %718 = vmatprep.subr.mxu0 %v333
    %719 = vmatpush1.msra.mxu0 %v332
    %720 = vmatprep.subr.mxu0 %v337
    %721 = vmatpush1.msra.mxu0 %v336
    %722 = vmatprep.subr.mxu0 %v341
    %723 = vmatpush1.msra.mxu0 %v340
    %724 = vmatprep.subr.mxu0 %v345
    %725 = vmatpush1.msra.mxu0 %v344
    %726 = vmatprep.subr.mxu0 %v349
    %727 = vmatpush1.msra.mxu0 %v348
    %728 = vmatprep.mubr.f32.mxu0 %v516
    %729 = vmatmul.mubr.f32.gmra.mrb[0].mxu0 %v508
    %v730 = vpop.f32.mrb[0].mxu0
    %v731 = vadd.f32 %v491, %v730
    %v732 = vpop.f32.mrb[0].mxu0
    %v733 = vadd.f32 %v495, %v732
    %734 = vdwg.mxu0
    %735 = vmatprep.subr.mxu0 %v353
    %736 = vmatpush1.msra.mxu0 %v352
    %737 = vmatprep.subr.mxu0 %v357
    %738 = vmatpush1.msra.mxu0 %v356
    %739 = vmatprep.subr.mxu0 %v361
    %740 = vmatpush1.msra.mxu0 %v360
    %741 = vmatprep.subr.mxu0 %v365
    %742 = vmatpush1.msra.mxu0 %v364
    %743 = vmatprep.subr.mxu0 %v369
    %744 = vmatpush1.msra.mxu0 %v368
    %745 = vmatprep.subr.mxu0 %v373
    %746 = vmatpush1.msra.mxu0 %v372
    %747 = vmatprep.subr.mxu0 %v377
    %748 = vmatpush1.msra.mxu0 %v376
    %749 = vmatprep.subr.mxu0 %v381
    %750 = vmatpush1.msra.mxu0 %v380
    %751 = vmatprep.subr.mxu0 %v385
    %752 = vmatpush1.msra.mxu0 %v384
    %753 = vmatprep.subr.mxu0 %v389
    %754 = vmatpush1.msra.mxu0 %v388
    %755 = vmatprep.subr.mxu0 %v393
    %756 = vmatpush1.msra.mxu0 %v392
    %757 = vmatprep.subr.mxu0 %v397
    %758 = vmatpush1.msra.mxu0 %v396
    %759 = vmatprep.subr.mxu0 %v401
    %760 = vmatpush1.msra.mxu0 %v400
    %761 = vmatprep.subr.mxu0 %v405
    %762 = vmatpush1.msra.mxu0 %v404
    %763 = vmatprep.subr.mxu0 %v409
    %764 = vmatpush1.msra.mxu0 %v408
    %765 = vmatprep.subr.mxu0 %v413
    %766 = vmatpush1.msra.mxu0 %v412
    %767 = vmatprep.subr.mxu0 %v417
    %768 = vmatpush1.msra.mxu0 %v416
    %769 = vmatprep.subr.mxu0 %v421
    %770 = vmatpush1.msra.mxu0 %v420
    %771 = vmatprep.subr.mxu0 %v425
    %772 = vmatpush1.msra.mxu0 %v424
    %773 = vmatprep.subr.mxu0 %v429
    %774 = vmatpush1.msra.mxu0 %v428
    %775 = vmatprep.subr.mxu0 %v433
    %776 = vmatpush1.msra.mxu0 %v432
    %777 = vmatprep.subr.mxu0 %v437
    %778 = vmatpush1.msra.mxu0 %v436
    %779 = vmatprep.subr.mxu0 %v441
    %780 = vmatpush1.msra.mxu0 %v440
    %781 = vmatprep.subr.mxu0 %v445
    %782 = vmatpush1.msra.mxu0 %v444
    %783 = vmatprep.subr.mxu0 %v449
    %784 = vmatpush1.msra.mxu0 %v448
    %785 = vmatprep.subr.mxu0 %v453
    %786 = vmatpush1.msra.mxu0 %v452
    %787 = vmatprep.subr.mxu0 %v457
    %788 = vmatpush1.msra.mxu0 %v456
    %789 = vmatprep.subr.mxu0 %v461
    %790 = vmatpush1.msra.mxu0 %v460
    %791 = vmatprep.subr.mxu0 %v465
    %792 = vmatpush1.msra.mxu0 %v464
    %793 = vmatprep.subr.mxu0 %v469
    %794 = vmatpush1.msra.mxu0 %v468
    %795 = vmatprep.subr.mxu0 %v473
    %796 = vmatpush1.msra.mxu0 %v472
    %797 = vmatprep.subr.mxu0 %v477
    %798 = vmatpush1.msra.mxu0 %v476
    %799 = vmatprep.mubr.f32.mxu0 %v517
    %800 = vmatmul.mubr.f32.gmra.mrb[0].mxu0 %v515
    %v801 = vpop.f32.mrb[0].mxu0
    %v802 = vadd.f32 %v731, %v801
    %v803 = vpop.f32.mrb[0].mxu0
    %v804 = vadd.f32 %v733, %v803
    %805 = vdwg.mxu0
    %v806 = vmul.f32 %v660, %v660
    %v807 = vmul.f32 %v662, %v662
    %v808 = vmul.f32 %v802, %v802
    %v809 = vmul.f32 %v804, %v804
    %v810 = vsel %vm83, %v806, 0.0
    %v811 = vsel %vm83, %v807, 0.0
    %v812 = vadd.f32 %v810, %v811
    %v813 = vsel %vm83, %v808, 0.0
    %v814 = vadd.f32 %v812, %v813
    %v815 = vsel %vm83, %v809, 0.0
    %v816 = vadd.f32 %v814, %v815
    %817 = vadd.xlane.f32.xlu0 %v816
    %v818 = vpop.xlane.xlu0 %817
    %v819 = vmax.f32 %v818, 1e-24
    %v820 = vrsqrt.pop %v819
    %v821 = vmul.f32 %v660, %v820
    %v822 = vmul.f32 %v662, %v820
    %v823 = vmul.f32 %v802, %v820
    %v824 = vmul.f32 %v804, %v820
    %v829 = vcombine.low %v821, %v822
    %v830 = vcombine.low %v823, %v824
    %v832 = vunpack.c.l.s4 1983009808
    %v833 = vunpack.c.0.s8 %v832
    %v834 = vlaneseq
    %v835 = vshrl.u32 %v834, 7
    %v836 = vsub.s32 %v833, %v835
    %v837 = vrot.slane %v829, %v836
    %v839 = vunpack.c.l.s4 1983009808
    %v840 = vunpack.c.0.s8 %v839
    %v841 = vlaneseq
    %v842 = vshrl.u32 %v841, 7
    %v843 = vsub.s32 %v840, %v842
    %v844 = vrot.slane %v830, %v843
    %v845 = vcombine.low %v837, %v844
    %847 = vst [vmem:[#allocation8] sm:$0xff] %v845
    // Predicated region
    $region34: #{tpu_custom_call.1} parent=1 // pred_check
      _
    $region35: #{tpu_custom_call.1} parent=1 // pred_check_branch
      %849 = sbr.rel (0) target = $region37
    $region36: #{tpu_custom_call.1} parent=1 // pred_region
      %s851 = ssub.s32 128, 128
      %852 = vsyncadd [#allocation4], %s851
      %s854 = sshll.u32 [#allocation8], 4
      %s855 = int_to_ptr.vmem [resolvable:$true] %s854
      %857 = dma.vmem_to_hbm [thread:$0]  %s855, 128, %s5, [#allocation4]
    $region37: #{tpu_custom_call.1} parent=1 // pred_fallthru
      _
    // Predicated region
    $region38: #{tpu_custom_call.1} parent=1 // pred_check
      _
    $region39: #{tpu_custom_call.1} parent=1 // pred_check_branch
      %859 = sbr.rel (0) target = $region41
    $region40: #{tpu_custom_call.1} parent=1 // pred_region
      %860 = dma.done [#allocation4], 128
    $region41: #{tpu_custom_call.1} parent=1 // pred_fallthru
      _
    %861 = vsyncpa [#allocation3], 1
    %862 = vsyncpa [#allocation6], 1
    %863 = vsyncpa [#allocation4], 1

</llo_original>
